<compile_context>
chip_gen: v7x
topology: tpu7x:2x2x1
jax: 0.10.0
libtpu: 0.0.40
codegen_flags: <defaults>
</compile_context>

<pallas_src>
import jax
import jax.numpy as jnp
from jax import lax
from jax.experimental import pallas as pl
from jax.experimental.pallas import tpu as pltpu


# ---------------------------------------------------------------------------
# In-kernel TensorGradient (L1=True) for one H-tile, matching the PyTorch
# reference (zero-padded backward differences):
#   grad[h, w] = |x[h, w-1] - x[h, w]| + |x[h-1, w] - x[h, w]|
# `top_row` is the image row just above the tile (zeros for the first tile).
# ---------------------------------------------------------------------------
def _grad_l1(x, top_row):
    # x: (B, C, TH, W) f32; top_row: (B, C, 1, W) f32
    lane = x.ndim - 1       # W  (lane axis)
    sub = x.ndim - 2        # TH (sublane axis)

    # Horizontal: x[..., w-1] with zero at w == 0.
    col = lax.broadcasted_iota(jnp.int32, x.shape, lane)
    left = jnp.where(col == 0, 0.0, pltpu.roll(x, shift=1, axis=lane))

    # Vertical: x[..., h-1, :] with the carried halo row at h == 0.
    row = lax.broadcasted_iota(jnp.int32, x.shape, sub)
    up = jnp.where(row == 0, jnp.broadcast_to(top_row, x.shape),
                   pltpu.roll(x, shift=1, axis=sub))

    return jnp.abs(left - x) + jnp.abs(up - x)


# ---------------------------------------------------------------------------
# Kernel: grid = (num_h_tiles, N).  H tiles outer (sequential, carries halos and
# keeps the gt tile resident); frames inner (sequential, reuses cached grad(gt)).
#   pred_ref  : (B, C, TH, W)  frame i / H-tile h of pred (N axis squeezed)
#   gt_ref    : (B, C, TH, W)  H-tile h of ground truth (resident across frames)
#   out_ref   : (TH, W) f32    per-(row, lane) partial sums (accumulator output)
#   ggrad_ref : (B, C, TH, W)  cached TensorGradient(gt) for the current tile
#   phalo_ref : (N, B, C, 1, W) last pred row of the previous tile, per frame
#   ghalo_ref : (B, C, 1, W)   last gt row of the previous tile
# ---------------------------------------------------------------------------
def _loss_anneal_kernel(pred_ref, gt_ref, out_ref, ggrad_ref, phalo_ref, ghalo_ref):
    h = pl.program_id(0)   # H-tile index (outer, sequential)
    i = pl.program_id(1)   # burst-frame index (inner, sequential)

    @pl.when(jnp.logical_and(h == 0, i == 0))
    def _init():
        out_ref[...] = jnp.zeros_like(out_ref)
        phalo_ref[...] = jnp.zeros_like(phalo_ref)   # zero halo above the first tile
        ghalo_ref[...] = jnp.zeros_like(ghalo_ref)

    g = gt_ref[...].astype(jnp.float32)

    # Compute grad(gt) for this tile once (at frame 0); reuse it for all frames.
    @pl.when(i == 0)
    def _cache_gt_grad():
        ggrad_ref[...] = _grad_l1(g, ghalo_ref[...])
        ghalo_ref[...] = g[:, :, -1:, :]             # halo for the next H-tile

    p = pred_ref[...].astype(jnp.float32)
    grad_p = _grad_l1(p, phalo_ref[i])               # read this frame's halo ...
    phalo_ref[i] = p[:, :, -1:, :]                   # ... then store the new one

    diff = p - g
    v = diff * diff + jnp.abs(grad_p - ggrad_ref[...])   # fused MSE + L1(grad) terms

    # Lane-dense partial sums: only cheap VPU adds over (B, C) each step; the
    # single cross-lane reduction + normalization + anneal scale run in the wrapper.
    out_ref[...] = out_ref[...] + jnp.sum(v, axis=(0, 1))


# ---------------------------------------------------------------------------
# Wrapper
# ---------------------------------------------------------------------------
def loss_anneal(global_step, pred_i, ground_truth, alpha=0.9998, beta=100.0,
                block_h=None):
    """pred_i: (B, N, C, H, W); ground_truth: (B, C, H, W). Returns scalar loss."""
    B, N, C, H, W = pred_i.shape
    assert ground_truth.shape == (B, C, H, W), ground_truth.shape

    itemsize = jnp.dtype(pred_i.dtype).itemsize

    # --- choose the H tile so the VMEM working set stays modest on all gens ----
    if block_h is None:
        # rough bytes per image row resident in VMEM (pred+gt double-buffered,
        # f32 grad cache, f32 accumulator), used only to pick a tile height.
        per_row = W * (B * C * (4 * itemsize + 4) + 8) + 1
        cap = max(8, (12 * 1024 * 1024) // per_row)
        if H <= cap:
            block_h = H
        else:
            divs = [d for d in range(8, int(min(H, cap)) + 1, 8) if H % d == 0]
            block_h = max(divs) if divs else H
    assert H % block_h == 0, (H, block_h)
    assert block_h == H or block_h % 8 == 0, block_h
    num_h = H // block_h

    # --- VMEM limit: cover the estimated working set, stay under v7x's 64 MiB ---
    tile_elems = B * C * block_h * W
    est = (4 * tile_elems * itemsize        # pred + gt, double-buffered
           + 4 * tile_elems                 # grad(gt) cache (f32)
           + 8 * block_h * W                # accumulator output (f32, 2 bufs)
           + 4 * (N + 1) * B * C * 8 * W)   # halo rows (sublane-padded)
    vmem_limit = int(min(max(2 * est, 32 * 1024 * 1024), 48 * 1024 * 1024))

    partial = pl.pallas_call(
        _loss_anneal_kernel,
        out_shape=jax.ShapeDtypeStruct((block_h, W), jnp.float32),
        grid_spec=pltpu.PrefetchScalarGridSpec(
            num_scalar_prefetch=0,
            grid=(num_h, N),
            in_specs=[
                # pred: native (B, N, C, H, W) layout, N squeezed, H tiled.
                pl.BlockSpec((B, None, C, block_h, W),
                             lambda ht, fr: (0, fr, 0, ht, 0)),
                # gt: tiled over H only; constant across the inner frame loop,
                # so each tile is DMA'd once and stays resident.
                pl.BlockSpec((B, C, block_h, W),
                             lambda ht, fr: (0, 0, ht, 0)),
            ],
            # Constant block index -> resident accumulator, written back once.
            out_specs=pl.BlockSpec((block_h, W), lambda ht, fr: (0, 0)),
            scratch_shapes=[
                pltpu.VMEM((B, C, block_h, W), jnp.float32),   # cached grad(gt) tile
                pltpu.VMEM((N, B, C, 1, W), jnp.float32),      # per-frame pred halo rows
                pltpu.VMEM((B, C, 1, W), jnp.float32),         # gt halo row
            ],
        ),
        compiler_params=pltpu.CompilerParams(
            # Both axes carry state (halo rows, grad(gt) cache, accumulator),
            # so both must be sequential.
            dimension_semantics=("arbitrary", "arbitrary"),
            vmem_limit_bytes=vmem_limit,
        ),
    )(pred_i, ground_truth)

    scale = jnp.float32(beta) * jnp.float32(alpha) ** jnp.float32(global_step)
    inv_total = 1.0 / float(B * C * H * W * N)   # per-frame mean + mean over frames
    return (scale * inv_total) * jnp.sum(partial)


# ---------------------------------------------------------------------------
# Pure-JAX reference (mirrors the PyTorch module) for validation.
# ---------------------------------------------------------------------------
def _tensor_gradient_ref(img):
    H, W = img.shape[-2], img.shape[-1]
    nb = img.ndim
    l = jnp.pad(img, [(0, 0)] * (nb - 1) + [(1, 0)])
    r = jnp.pad(img, [(0, 0)] * (nb - 1) + [(0, 1)])
    u = jnp.pad(img, [(0, 0)] * (nb - 2) + [(1, 0), (0, 0)])
    d = jnp.pad(img, [(0, 0)] * (nb - 2) + [(0, 1), (0, 0)])
    return jnp.abs((l - r)[..., :H, :W]) + jnp.abs((u - d)[..., :H, :W])


def loss_anneal_ref(global_step, pred_i, gt, alpha=0.9998, beta=100.0):
    N = pred_i.shape[1]
    g_grad = _tensor_gradient_ref(gt)
    loss = 0.0
    for i in range(N):
        p = pred_i[:, i]
        loss = loss + jnp.mean((p - gt) ** 2)
        loss = loss + jnp.mean(jnp.abs(_tensor_gradient_ref(p) - g_grad))
    loss = loss / N
    scale = jnp.float32(beta) * jnp.float32(alpha) ** jnp.float32(global_step)
    return scale * loss


if __name__ == "__main__":
    # Small but lane-dense shapes (W = 128 fills the vector lanes); block_h=16
    # deliberately exercises the H-tiling + halo-carry path (2 H tiles).
    B, N, C, H, W = 2, 4, 3, 32, 128
    key = jax.random.PRNGKey(0)
    kp, kg = jax.random.split(key)
    pred_i = jax.random.normal(kp, (B, N, C, H, W), jnp.float32)
    gt = jax.random.normal(kg, (B, C, H, W), jnp.float32)
    global_step = 1000

    out = loss_anneal(global_step, pred_i, gt, block_h=16)
    out = jax.block_until_ready(out)

    ref = loss_anneal_ref(global_step, pred_i, gt)
    assert out.shape == (), out.shape
    assert bool(jnp.isfinite(out))
    assert bool(jnp.allclose(out, ref, rtol=2e-4, atol=1e-4)), (float(out), float(ref))
    print("KERNEL_OK")
</pallas_src>

<mosaic_0001>
module attributes {stable_mosaic.version = 11 : i64} {
  func.func @_loss_anneal_kernel(%arg0: i32, %arg1: i32, %arg2: memref<2x1x3x16x128xf32, #tpu.memory_space<vmem>>, %arg3: memref<2x3x16x128xf32, #tpu.memory_space<vmem>>, %arg4: memref<16x128xf32, #tpu.memory_space<vmem>>, %arg5: memref<2x3x16x128xf32, #tpu.memory_space<vmem>>, %arg6: memref<4x2x3x1x128xf32, #tpu.memory_space<vmem>>, %arg7: memref<2x3x1x128xf32, #tpu.memory_space<vmem>>) attributes {dimension_semantics = [#tpu.dimension_semantics<arbitrary>, #tpu.dimension_semantics<arbitrary>], iteration_bounds = array<i64: 2, 4>, scalar_prefetch = 0 : i64, scratch_operands = 3 : i64, tpu.core_type = #tpu.core_type<tc>, window_params = [{transform_indices = @transform_0, window_bounds = array<i64: 2, 1, 3, 16, 128>}, {transform_indices = @transform_1, window_bounds = array<i64: 2, 3, 16, 128>}, {pipeline_mode = #tpu.pipeline_mode<synchronous>, transform_indices = @transform_2, window_bounds = array<i64: 16, 128>}]} {
    %c0_i32 = arith.constant 0 : i32
    %0 = arith.cmpi eq, %arg0, %c0_i32 : i32
    %c0_i32_0 = arith.constant 0 : i32
    %1 = arith.cmpi eq, %arg1, %c0_i32_0 : i32
    %2 = arith.andi %0, %1 : i1
    %3 = arith.extui %2 : i1 to i32
    %c0_i32_1 = arith.constant 0 : i32
    %4 = arith.cmpi ne, %3, %c0_i32_1 : i32
    scf.if %4 {
      %cst_32 = arith.constant 0.000000e+00 : f32
      %47 = vector.broadcast %cst_32 : f32 to vector<16x128xf32>
      %c0_33 = arith.constant 0 : index
      %c0_34 = arith.constant 0 : index
      %48 = vector.load %arg4[%c0_33, %c0_34] : memref<16x128xf32, #tpu.memory_space<vmem>>, vector<16x128xf32>
      tpu.vector_store %arg4[%c0_33, %c0_34], %47 {strides = array<i32>} : memref<16x128xf32, #tpu.memory_space<vmem>>, vector<16x128xf32>,
      %cst_35 = arith.constant 0.000000e+00 : f32
      %49 = vector.broadcast %cst_35 : f32 to vector<4x2x3x1x128xf32>
      %c0_36 = arith.constant 0 : index
      %c0_37 = arith.constant 0 : index
      %c0_38 = arith.constant 0 : index
      %c0_39 = arith.constant 0 : index
      %c0_40 = arith.constant 0 : index
      %50 = vector.load %arg6[%c0_36, %c0_37, %c0_38, %c0_39, %c0_40] : memref<4x2x3x1x128xf32, #tpu.memory_space<vmem>>, vector<4x2x3x1x128xf32>
      tpu.vector_store %arg6[%c0_36, %c0_37, %c0_38, %c0_39, %c0_40], %49 {strides = array<i32>} : memref<4x2x3x1x128xf32, #tpu.memory_space<vmem>>, vector<4x2x3x1x128xf32>,
      %cst_41 = arith.constant 0.000000e+00 : f32
      %51 = vector.broadcast %cst_41 : f32 to vector<2x3x1x128xf32>
      %c0_42 = arith.constant 0 : index
      %c0_43 = arith.constant 0 : index
      %c0_44 = arith.constant 0 : index
      %c0_45 = arith.constant 0 : index
      %52 = vector.load %arg7[%c0_42, %c0_43, %c0_44, %c0_45] : memref<2x3x1x128xf32, #tpu.memory_space<vmem>>, vector<2x3x1x128xf32>
      tpu.vector_store %arg7[%c0_42, %c0_43, %c0_44, %c0_45], %51 {strides = array<i32>} : memref<2x3x1x128xf32, #tpu.memory_space<vmem>>, vector<2x3x1x128xf32>,
    } else {
    }
    %c0 = arith.constant 0 : index
    %c0_2 = arith.constant 0 : index
    %c0_3 = arith.constant 0 : index
    %c0_4 = arith.constant 0 : index
    %5 = vector.load %arg3[%c0, %c0_2, %c0_3, %c0_4] : memref<2x3x16x128xf32, #tpu.memory_space<vmem>>, vector<2x3x16x128xf32>
    %c0_i32_5 = arith.constant 0 : i32
    %6 = arith.cmpi eq, %arg1, %c0_i32_5 : i32
    %7 = arith.extui %6 : i1 to i32
    %c0_i32_6 = arith.constant 0 : i32
    %8 = arith.cmpi ne, %7, %c0_i32_6 : i32
    scf.if %8 {
      %c0_32 = arith.constant 0 : index
      %c0_33 = arith.constant 0 : index
      %c0_34 = arith.constant 0 : index
      %c0_35 = arith.constant 0 : index
      %47 = vector.load %arg7[%c0_32, %c0_33, %c0_34, %c0_35] : memref<2x3x1x128xf32, #tpu.memory_space<vmem>>, vector<2x3x1x128xf32>
      %48 = tpu.iota {dimensions = array<i32: 3>} : vector<2x3x16x128xi32>
      %c0_i32_36 = arith.constant 0 : i32
      %49 = vector.broadcast %c0_i32_36 : i32 to vector<2x3x16x128xi32>
      %50 = arith.cmpi eq, %48, %49 : vector<2x3x16x128xi32>
      %c1_i32_37 = arith.constant 1 : i32
      %51 = tpu.dynamic_rotate %5 by %c1_i32_37 dim 3 : vector<2x3x16x128xf32>, i32 -> vector<2x3x16x128xf32>
      %cst_38 = arith.constant 0.000000e+00 : f32
      %52 = vector.broadcast %cst_38 : f32 to vector<2x3x16x128xf32>
      %53 = arith.select %50, %52, %51 : vector<2x3x16x128xi1>, vector<2x3x16x128xf32>
      %54 = tpu.iota {dimensions = array<i32: 2>} : vector<2x3x16x128xi32>
      %c0_i32_39 = arith.constant 0 : i32
      %55 = vector.broadcast %c0_i32_39 : i32 to vector<2x3x16x128xi32>
      %56 = arith.cmpi eq, %54, %55 : vector<2x3x16x128xi32>
      %57 = vector.shape_cast %47 : vector<2x3x1x128xf32> to vector<2x3x1x128xf32>
      %58 = vector.broadcast %57 : vector<2x3x1x128xf32> to vector<2x3x16x128xf32>
      %c1_i32_40 = arith.constant 1 : i32
      %59 = tpu.dynamic_rotate %5 by %c1_i32_40 dim 2 : vector<2x3x16x128xf32>, i32 -> vector<2x3x16x128xf32>
      %60 = arith.select %56, %58, %59 : vector<2x3x16x128xi1>, vector<2x3x16x128xf32>
      %61 = arith.subf %53, %5 : vector<2x3x16x128xf32>
      %62 = math.absf %61 : vector<2x3x16x128xf32>
      %63 = arith.subf %60, %5 : vector<2x3x16x128xf32>
      %64 = math.absf %63 : vector<2x3x16x128xf32>
      %65 = arith.addf %62, %64 : vector<2x3x16x128xf32>
      %c0_41 = arith.constant 0 : index
      %c0_42 = arith.constant 0 : index
      %c0_43 = arith.constant 0 : index
      %c0_44 = arith.constant 0 : index
      %66 = vector.load %arg5[%c0_41, %c0_42, %c0_43, %c0_44] : memref<2x3x16x128xf32, #tpu.memory_space<vmem>>, vector<2x3x16x128xf32>
      tpu.vector_store %arg5[%c0_41, %c0_42, %c0_43, %c0_44], %65 {strides = array<i32>} : memref<2x3x16x128xf32, #tpu.memory_space<vmem>>, vector<2x3x16x128xf32>,
      %67 = vector.extract_strided_slice %5 {offsets = [0, 0, 15, 0], sizes = [2, 3, 1, 128], strides = [1, 1, 1, 1]} : vector<2x3x16x128xf32> to vector<2x3x1x128xf32>
      %c0_45 = arith.constant 0 : index
      %c0_46 = arith.constant 0 : index
      %c0_47 = arith.constant 0 : index
      %c0_48 = arith.constant 0 : index
      %68 = vector.load %arg7[%c0_45, %c0_46, %c0_47, %c0_48] : memref<2x3x1x128xf32, #tpu.memory_space<vmem>>, vector<2x3x1x128xf32>
      tpu.vector_store %arg7[%c0_45, %c0_46, %c0_47, %c0_48], %67 {strides = array<i32>} : memref<2x3x1x128xf32, #tpu.memory_space<vmem>>, vector<2x3x1x128xf32>,
    } else {
    }
    %c0_7 = arith.constant 0 : index
    %c0_8 = arith.constant 0 : index
    %c0_9 = arith.constant 0 : index
    %c0_10 = arith.constant 0 : index
    %c0_11 = arith.constant 0 : index
    %9 = vector.load %arg2[%c0_7, %c0_8, %c0_9, %c0_10, %c0_11] : memref<2x1x3x16x128xf32, #tpu.memory_space<vmem>>, vector<2x1x3x16x128xf32>
    %10 = vector.shape_cast %9 : vector<2x1x3x16x128xf32> to vector<2x3x16x128xf32>
    %11 = arith.index_cast %arg1 : i32 to index
    %c0_12 = arith.constant 0 : index
    %c0_13 = arith.constant 0 : index
    %c0_14 = arith.constant 0 : index
    %c0_15 = arith.constant 0 : index
    %12 = vector.load %arg6[%11, %c0_12, %c0_13, %c0_14, %c0_15] : memref<4x2x3x1x128xf32, #tpu.memory_space<vmem>>, vector<1x2x3x1x128xf32>
    %13 = vector.shape_cast %12 : vector<1x2x3x1x128xf32> to vector<2x3x1x128xf32>
    %14 = tpu.iota {dimensions = array<i32: 3>} : vector<2x3x16x128xi32>
    %c0_i32_16 = arith.constant 0 : i32
    %15 = vector.broadcast %c0_i32_16 : i32 to vector<2x3x16x128xi32>
    %16 = arith.cmpi eq, %14, %15 : vector<2x3x16x128xi32>
    %c1_i32 = arith.constant 1 : i32
    %17 = tpu.dynamic_rotate %10 by %c1_i32 dim 3 : vector<2x3x16x128xf32>, i32 -> vector<2x3x16x128xf32>
    %cst = arith.constant 0.000000e+00 : f32
    %18 = vector.broadcast %cst : f32 to vector<2x3x16x128xf32>
    %19 = arith.select %16, %18, %17 : vector<2x3x16x128xi1>, vector<2x3x16x128xf32>
    %20 = tpu.iota {dimensions = array<i32: 2>} : vector<2x3x16x128xi32>
    %c0_i32_17 = arith.constant 0 : i32
    %21 = vector.broadcast %c0_i32_17 : i32 to vector<2x3x16x128xi32>
    %22 = arith.cmpi eq, %20, %21 : vector<2x3x16x128xi32>
    %23 = vector.shape_cast %13 : vector<2x3x1x128xf32> to vector<2x3x1x128xf32>
    %24 = vector.broadcast %23 : vector<2x3x1x128xf32> to vector<2x3x16x128xf32>
    %c1_i32_18 = arith.constant 1 : i32
    %25 = tpu.dynamic_rotate %10 by %c1_i32_18 dim 2 : vector<2x3x16x128xf32>, i32 -> vector<2x3x16x128xf32>
    %26 = arith.select %22, %24, %25 : vector<2x3x16x128xi1>, vector<2x3x16x128xf32>
    %27 = arith.subf %19, %10 : vector<2x3x16x128xf32>
    %28 = math.absf %27 : vector<2x3x16x128xf32>
    %29 = arith.subf %26, %10 : vector<2x3x16x128xf32>
    %30 = math.absf %29 : vector<2x3x16x128xf32>
    %31 = arith.addf %28, %30 : vector<2x3x16x128xf32>
    %32 = vector.extract_strided_slice %10 {offsets = [0, 0, 15, 0], sizes = [2, 3, 1, 128], strides = [1, 1, 1, 1]} : vector<2x3x16x128xf32> to vector<2x3x1x128xf32>
    %33 = arith.index_cast %arg1 : i32 to index
    %c0_19 = arith.constant 0 : index
    %c0_20 = arith.constant 0 : index
    %c0_21 = arith.constant 0 : index
    %c0_22 = arith.constant 0 : index
    %34 = vector.load %arg6[%33, %c0_19, %c0_20, %c0_21, %c0_22] : memref<4x2x3x1x128xf32, #tpu.memory_space<vmem>>, vector<1x2x3x1x128xf32>
    %35 = vector.shape_cast %34 : vector<1x2x3x1x128xf32> to vector<2x3x1x128xf32>
    %36 = vector.shape_cast %32 : vector<2x3x1x128xf32> to vector<1x2x3x1x128xf32>
    tpu.vector_store %arg6[%33, %c0_19, %c0_20, %c0_21, %c0_22], %36 {strides = array<i32>} : memref<4x2x3x1x128xf32, #tpu.memory_space<vmem>>, vector<1x2x3x1x128xf32>,
    %37 = arith.subf %10, %5 : vector<2x3x16x128xf32>
    %38 = arith.mulf %37, %37 : vector<2x3x16x128xf32>
    %c0_23 = arith.constant 0 : index
    %c0_24 = arith.constant 0 : index
    %c0_25 = arith.constant 0 : index
    %c0_26 = arith.constant 0 : index
    %39 = vector.load %arg5[%c0_23, %c0_24, %c0_25, %c0_26] : memref<2x3x16x128xf32, #tpu.memory_space<vmem>>, vector<2x3x16x128xf32>
    %40 = arith.subf %31, %39 : vector<2x3x16x128xf32>
    %41 = math.absf %40 : vector<2x3x16x128xf32>
    %42 = arith.addf %38, %41 : vector<2x3x16x128xf32>
    %c0_27 = arith.constant 0 : index
    %c0_28 = arith.constant 0 : index
    %43 = vector.load %arg4[%c0_27, %c0_28] : memref<16x128xf32, #tpu.memory_space<vmem>>, vector<16x128xf32>
    %cst_29 = arith.constant dense<0.000000e+00> : vector<16x128xf32>
    %44 = vector.multi_reduction <add>, %42, %cst_29 [0, 1] : vector<2x3x16x128xf32> to vector<16x128xf32>
    %45 = arith.addf %43, %44 : vector<16x128xf32>
    %c0_30 = arith.constant 0 : index
    %c0_31 = arith.constant 0 : index
    %46 = vector.load %arg4[%c0_30, %c0_31] : memref<16x128xf32, #tpu.memory_space<vmem>>, vector<16x128xf32>
    tpu.vector_store %arg4[%c0_30, %c0_31], %45 {strides = array<i32>} : memref<16x128xf32, #tpu.memory_space<vmem>>, vector<16x128xf32>,
    return
  }
  func.func @transform_0(%arg0: i32, %arg1: i32) -> (i32, i32, i32, i32, i32) {
    %c0_i32 = arith.constant 0 : i32
    %c0_i32_0 = arith.constant 0 : i32
    %c0_i32_1 = arith.constant 0 : i32
    %c0_i32_2 = arith.constant 0 : i32
    return %c0_i32, %arg1, %c0_i32_0, %arg0, %c0_i32_1 : i32, i32, i32, i32, i32
  }
  func.func @transform_1(%arg0: i32, %arg1: i32) -> (i32, i32, i32, i32) {
    %c0_i32 = arith.constant 0 : i32
    %c0_i32_0 = arith.constant 0 : i32
    %c0_i32_1 = arith.constant 0 : i32
    %c0_i32_2 = arith.constant 0 : i32
    return %c0_i32, %c0_i32_0, %arg0, %c0_i32_1 : i32, i32, i32, i32
  }
  func.func @transform_2(%arg0: i32, %arg1: i32) -> (i32, i32) {
    %c0_i32 = arith.constant 0 : i32
    %c0_i32_0 = arith.constant 0 : i32
    %c0_i32_1 = arith.constant 0 : i32
    return %c0_i32, %c0_i32_0 : i32, i32
  }
}

</mosaic_0001>

<llo_original>
// kernel: tpu_custom_call.1
$region0: #{tpu_custom_call.1}
  #allocation0 [shape = 'u32[]', space=smem, size = 0x4, offset = 0x4, fixed_abs, tag = 'smem constant byte address 0x4 - core index']
  #allocation1 [shape = 'u32[144,128]{1,0:T(1,128)}', space=vmem, size = 0x12000, scoped, tag = 'internal scratch']
  #allocation2 [shape = 'f32[2,3,16,128]{3,2,1,0:T(8,128)}', space=vmem, size = 0xc000, scoped, tag = 'scratch operand']
  #allocation3 [shape = 'f32[4,2,3,1,128]{4,3,2,1,0:T(1,128)}', space=vmem, size = 0x3000, scoped, tag = 'scratch operand']
  #allocation4 [shape = 'f32[2,3,1,128]{3,2,1,0:T(1,128)}', space=vmem, size = 0xc00, scoped, tag = 'scratch operand']
  #allocation11 [shape = 's32[]', space=sflag, size = 0x4, offset = 0, fixed_abs, tag = 'sflag constant byte address 0x0 - dummy sync flag']
  #allocation13 [shape = 's32[]', space=sflag, size = 0x4, offset = 0, fixed_abs, tag = 'sflag constant byte address 0x0 - dummy sync flag']
  %s0 = inlined_call_operand.hbm [shape: f32[2,4,3,32,128], index: 0, kind: input, shape index: {}]
  %s1 = inlined_call_operand.hbm [shape: f32[2,3,32,128], index: 1, kind: input, shape index: {}]
  %s2 = inlined_call_operand.hbm [shape: f32[16,128], index: 2, kind: output, shape index: {}]
  %s3 = sld [smem:[#allocation0]]
  $region57: #{tpu_custom_call.1} parent=0
    _
  %s5 = ssub.s32 1, %s3
  %s6 = scalar_select 0, %s5, %s3
  $region1: #{tpu_custom_call.1} parent=0
    #allocation5 [shape = 'u8[98304]{0}', space=vmem, size = 0x18000, scoped, tag = 'input window, operand 0']
    #allocation6 [shape = 's32[2]{0}', space=sflag, size = 0x8, scoped, tag = 'scoped memory for tpu_custom_call.1']
    #allocation7 [shape = 's32[2]{0}', space=sflag, size = 0x8, scoped, tag = 'scoped memory for tpu_custom_call.1']
    #allocation8 [shape = 'u8[98304]{0}', space=vmem, size = 0x18000, scoped, tag = 'input window, operand 1']
    #allocation9 [shape = 's32[2]{0}', space=sflag, size = 0x8, scoped, tag = 'scoped memory for tpu_custom_call.1']
    #allocation10 [shape = 'u8[8192]{0}', space=vmem, size = 0x2000, scoped, tag = 'output window, operand 0, single buffered']
    %7 = vsyncpa [#allocation6], 0
    %s8 = scalar_lea.sflag [#allocation6], 1
    %9 = vsyncpa %s8, 0
    %10 = vsyncpa [#allocation9], 0
    %s11 = scalar_lea.sflag [#allocation9], 1
    %12 = vsyncpa %s11, 0
    %13 = vsyncpa [#allocation7], 0
    loop: start=0, step=1, limit=10
    $region2: #{tpu_custom_call.1} parent=1 // loop_pre_header
      _
    $region3: #{tpu_custom_call.1} parent=1 // loop_header
      %s15 = sphi 0, %s19
      %p16 = scmp.ge.s32.totalorder %s15, 10
      %s22 = sphi 0, %s34
      %s23 = sphi 0, %s30
      %s24 = sphi 0, %s22
      %s25 = sphi 0, %s23
      %s26 = sphi 0, %s24
      %s27 = sphi 0, %s25
      %s39 = sphi 0, %s41
      %s42 = sphi 0, %s39
      %s43 = sphi 0, %s42
      %s59 = sphi 0, %s43
      %s65 = sphi 0, %s67
      %s68 = sphi 0, %s65
      %s69 = sphi 0, %s68
      %s85 = sphi 0, %s69
      %s89 = sphi 0, %s89
      %s91 = sphi 0, %s89
      %s92 = sphi 0, %s91
      %s106 = sphi 0, %s92
    $region4: #{tpu_custom_call.1} parent=1 // loop_header_branch
      %18 = sbr.rel (%p16) target = $region8
    $region5: #{tpu_custom_call.1} parent=1 // loop_body
      %s20 = ssub.s32 %s15, 1
      %s21 = ssub.s32 %s15, 2
      %s28 = sadd.s32 1, %s23
      %p29 = scmp.ge.s32.totalorder %s28, 4
      %s30 = scalar_select %p29, 0, %s28
      %s31 = sadd.s32 1, %s22
      %s32 = scalar_select %p29, %s31, %s22
      %p33 = scmp.ge.s32.totalorder %s32, 2
      %s34 = scalar_select %p33, 0, %s32
      %s35 = ssub.s32 %s23, %s30
      %s36 = ssub.s32 %s22, %s34
      %s37 = sor.u32 %s35, %s36
      %p38 = scmp.eq.s32.totalorder %s37, 0
      %s40 = sadd.s32 %s39, 1
      %s41 = scalar_select %p38, %s39, %s40
      %p44 = pneg %p38
      %p45 = scmp.eq.s32.totalorder %s15, 7
      %p46 = por %p44, %p45
      %p47 = scmp.ne.s32.totalorder %s39, %s42
      %p48 = scmp.eq.s32.totalorder %s15, 0
      %p49 = por %p47, %p48
      %p50 = scmp.ne.s32.totalorder %s39, %s42
      %p51 = scmp.eq.s32.totalorder %s20, 7
      %p52 = por %p50, %p51
      %p53 = scmp.ne.s32.totalorder %s42, %s43
      %p54 = scmp.eq.s32.totalorder %s20, 0
      %p55 = por %p53, %p54
      %p56 = scmp.ne.s32.totalorder %s42, %s43
      %p57 = scmp.eq.s32.totalorder %s21, 7
      %p58 = por %p56, %p57
      %p60 = scmp.ne.s32.totalorder %s43, %s59
      %p61 = scmp.eq.s32.totalorder %s21, 0
      %p62 = por %p60, %p61
      %s63 = ssub.s32 %s22, %s34
      %p64 = scmp.eq.s32.totalorder %s63, 0
      %s66 = sadd.s32 %s65, 1
      %s67 = scalar_select %p64, %s65, %s66
      %p70 = pneg %p64
      %p71 = scmp.eq.s32.totalorder %s15, 7
      %p72 = por %p70, %p71
      %p73 = scmp.ne.s32.totalorder %s65, %s68
      %p74 = scmp.eq.s32.totalorder %s15, 0
      %p75 = por %p73, %p74
      %p76 = scmp.ne.s32.totalorder %s65, %s68
      %p77 = scmp.eq.s32.totalorder %s20, 7
      %p78 = por %p76, %p77
      %p79 = scmp.ne.s32.totalorder %s68, %s69
      %p80 = scmp.eq.s32.totalorder %s20, 0
      %p81 = por %p79, %p80
      %p82 = scmp.ne.s32.totalorder %s68, %s69
      %p83 = scmp.eq.s32.totalorder %s21, 7
      %p84 = por %p82, %p83
      %p86 = scmp.ne.s32.totalorder %s69, %s85
      %p87 = scmp.eq.s32.totalorder %s21, 0
      %p88 = por %p86, %p87
      %s90 = sadd.s32 %s89, 1
      %p93 = scmp.eq.s32.totalorder %s15, 7
      %p94 = scmp.ne.s32.totalorder %s89, %s91
      %p95 = scmp.eq.s32.totalorder %s15, 0
      %p96 = por %p94, %p95
      %p97 = scmp.ne.s32.totalorder %s89, %s91
      %p98 = scmp.eq.s32.totalorder %s20, 7
      %p99 = por %p97, %p98
      %p100 = scmp.ne.s32.totalorder %s91, %s92
      %p101 = scmp.eq.s32.totalorder %s20, 0
      %p102 = por %p100, %p101
      %p103 = scmp.ne.s32.totalorder %s91, %s92
      %p104 = scmp.eq.s32.totalorder %s21, 7
      %p105 = por %p103, %p104
      %p107 = scmp.ne.s32.totalorder %s92, %s106
      %p108 = scmp.eq.s32.totalorder %s21, 0
      %p109 = por %p107, %p108
      %p110 = scmp.le.s32.totalorder 1, %s15
      %p111 = scmp.lt.s32.totalorder %s15, 9
      %p112 = pnand %p110, %p111
      %p113 = pneg %p112
      // Predicated region
      $region9: #{tpu_custom_call.1} parent=5 // pred_check
        _
      $region10: #{tpu_custom_call.1} parent=5 // pred_check_branch
        %115 = sbr.rel (%p112) target = $region12
      $region11: #{tpu_custom_call.1} parent=5 // pred_region
        %s116 = ssub.s32 %s15, 1
      $region12: #{tpu_custom_call.1} parent=5 // pred_fallthru
        _
      %p117 = scmp.lt.s32.totalorder %s15, 8
      // Predicated region
      $region13: #{tpu_custom_call.1} parent=5 // pred_check
        %p118 = pneg %p117
      $region14: #{tpu_custom_call.1} parent=5 // pred_check_branch
        %120 = sbr.rel (%p118) target = $region16
      $region15: #{tpu_custom_call.1} parent=5 // pred_region
        // Predicated region
        $region17: #{tpu_custom_call.1} parent=15 // pred_check
          %p121 = pneg %p49
        $region18: #{tpu_custom_call.1} parent=15 // pred_check_branch
          %123 = sbr.rel (%p121) target = $region20
        $region19: #{tpu_custom_call.1} parent=15 // pred_region
          #allocation12 [shape = 'u32[9]{0}', space=smem, size = 0x24, scoped, tag = 'DMA stride descriptor']
          %s124 = sand.u32 %s39, 1
          %s125 = scalar_lea.sflag [#allocation6], %s124
          %s126 = sand.u32 %s39, 1
          %s127 = smul.addr %s126, 96
          %s128 = scalar_lea.vmem [#allocation5], %s127
          %s129 = smul.u32 2, %s22
          %s131 = ssub.s32 1536, 1536
          %132 = vsyncadd %s125, %s131
          %s133 = smul.addr %s23, 12
          %s134 = sadd.s32 %s129, %s133
          %s135 = smul.addr %s134, 128
          %s136 = scalar_lea.hbm %s0, %s135
          %s138 = sshll.u32 1, 14
          %s139 = sxor.u32 4294967295, %s138
          %s141 = sld [smem:[#allocation0]]
          %s142 = sadd.s32 2, %s141
          %s144 = sshll.u32 7, 26
          %s145 = sxor.u32 4294967295, %s144
          %s146 = sand.u32 0, %s145
          %s147 = sshll.u32 %s142, 26
          %s148 = sor.u32 %s146, %s147
          %s149 = sshll.u32 %s128, 4
          %s150 = int_to_ptr.vmem [resolvable:$true] %s149
          %158 = sst [smem:[#allocation12]] 6144
          %s159 = scalar_lea.smem [#allocation12], 1
          %160 = sst [smem:[%s159]] 768
          %s161 = scalar_lea.smem [#allocation12], 2
          %162 = sst [smem:[%s161]] 3
          %s163 = scalar_lea.smem [#allocation12], 3
          %164 = sst [smem:[%s163]] 512
          %s165 = scalar_lea.smem [#allocation12], 4
          %166 = sst [smem:[%s165]] 256
          %s167 = scalar_lea.smem [#allocation12], 5
          %168 = sst [smem:[%s167]] 2
          %s169 = scalar_lea.smem [#allocation12], 6
          %170 = sst [smem:[%s169]] 128
          %s171 = scalar_lea.smem [#allocation12], 7
          %172 = sst [smem:[%s171]] 128
          %s173 = scalar_lea.smem [#allocation12], 8
          %174 = sst [smem:[%s173]] 8
          %176 = dma.general %s136, 1536, %s150, %s125, [#allocation11], [#allocation12], %s148, 0
        $region20: #{tpu_custom_call.1} parent=15 // pred_fallthru
          _
        // Predicated region
        $region21: #{tpu_custom_call.1} parent=15 // pred_check
          %p177 = pneg %p75
        $region22: #{tpu_custom_call.1} parent=15 // pred_check_branch
          %179 = sbr.rel (%p177) target = $region24
        $region23: #{tpu_custom_call.1} parent=15 // pred_region
          #allocation14 [shape = 'u32[6]{0}', space=smem, size = 0x18, scoped, tag = 'DMA stride descriptor']
          %s180 = sand.u32 %s65, 1
          %s181 = scalar_lea.sflag [#allocation9], %s180
          %s182 = sand.u32 %s65, 1
          %s183 = smul.addr %s182, 96
          %s184 = scalar_lea.vmem [#allocation8], %s183
          %s185 = smul.u32 2, %s22
          %s187 = ssub.s32 1536, 1536
          %188 = vsyncadd %s181, %s187
          %s189 = smul.addr %s185, 128
          %s190 = scalar_lea.hbm %s1, %s189
          %s192 = sshll.u32 1, 14
          %s193 = sxor.u32 4294967295, %s192
          %s195 = sld [smem:[#allocation0]]
          %s196 = sadd.s32 2, %s195
          %s198 = sshll.u32 7, 26
          %s199 = sxor.u32 4294967295, %s198
          %s200 = sand.u32 0, %s199
          %s201 = sshll.u32 %s196, 26
          %s202 = sor.u32 %s200, %s201
          %s203 = sshll.u32 %s184, 4
          %s204 = int_to_ptr.vmem [resolvable:$true] %s203
          %210 = sst [smem:[#allocation14]] 512
          %s211 = scalar_lea.smem [#allocation14], 1
          %212 = sst [smem:[%s211]] 256
          %s213 = scalar_lea.smem [#allocation14], 2
          %214 = sst [smem:[%s213]] 2
          %s215 = scalar_lea.smem [#allocation14], 3
          %216 = sst [smem:[%s215]] 128
          %s217 = scalar_lea.smem [#allocation14], 4
          %218 = sst [smem:[%s217]] 128
          %s219 = scalar_lea.smem [#allocation14], 5
          %220 = sst [smem:[%s219]] 8
          %222 = dma.general %s190, 1536, %s204, %s181, [#allocation13], [#allocation14], %s202, 0
        $region24: #{tpu_custom_call.1} parent=15 // pred_fallthru
          _
      $region16: #{tpu_custom_call.1} parent=5 // pred_fallthru
        _
      %p223 = scmp.le.s32.totalorder 1, %s15
      %p224 = scmp.lt.s32.totalorder %s15, 9
      %p225 = pnand %p223, %p224
      %p226 = pneg %p225
      // Predicated region
      $region25: #{tpu_custom_call.1} parent=5 // pred_check
        _
      $region26: #{tpu_custom_call.1} parent=5 // pred_check_branch
        %228 = sbr.rel (%p225) target = $region28
      $region27: #{tpu_custom_call.1} parent=5 // pred_region
        %s229 = ssub.s32 %s15, 1
        %s230 = sand.u32 %s42, 1
        %s231 = scalar_lea.sflag [#allocation6], %s230
        %s232 = sand.u32 %s42, 1
        %s233 = smul.addr %s232, 96
        %s234 = scalar_lea.vmem [#allocation5], %s233
        // Predicated region
        $region29: #{tpu_custom_call.1} parent=27 // pred_check
          %p235 = pneg %p55
        $region30: #{tpu_custom_call.1} parent=27 // pred_check_branch
          %237 = sbr.rel (%p235) target = $region32
        $region31: #{tpu_custom_call.1} parent=27 // pred_region
          %238 = dma.done %s231, 1536
        $region32: #{tpu_custom_call.1} parent=27 // pred_fallthru
          _
        %s239 = sand.u32 %s68, 1
        %s240 = scalar_lea.sflag [#allocation9], %s239
        %s241 = sand.u32 %s68, 1
        %s242 = smul.addr %s241, 96
        %s243 = scalar_lea.vmem [#allocation8], %s242
        // Predicated region
        $region33: #{tpu_custom_call.1} parent=27 // pred_check
          %p244 = pneg %p81
        $region34: #{tpu_custom_call.1} parent=27 // pred_check_branch
          %246 = sbr.rel (%p244) target = $region36
        $region35: #{tpu_custom_call.1} parent=27 // pred_region
          %247 = dma.done %s240, 1536
        $region36: #{tpu_custom_call.1} parent=27 // pred_fallthru
          _
        %s248 = sand.u32 %s42, 1
        %s249 = scalar_lea.sflag [#allocation6], %s248
        %s250 = sand.u32 %s42, 1
        %s251 = smul.addr %s250, 96
        %s252 = scalar_lea.vmem [#allocation5], %s251
        %p253 = pneg %p55
        %p254 = pneg %p52
        %s255 = sand.u32 %s68, 1
        %s256 = scalar_lea.sflag [#allocation9], %s255
        %s257 = sand.u32 %s68, 1
        %s258 = smul.addr %s257, 96
        %s259 = scalar_lea.vmem [#allocation8], %s258
        %p260 = pneg %p81
        %p261 = pneg %p78
        %p262 = pneg %p102
        %p263 = pneg %p99
        %s264 = smul.u32 2, %s24
        %s265 = smul.u32 2, %s24
        %p266 = scmp.eq.s32.totalorder %s24, 0
        %p267 = scmp.eq.s32.totalorder %s25, 0
        %p268 = pnand %p266, %p267
        %p269 = pneg %p268
        // Predicated region
        $region37: #{tpu_custom_call.1} parent=27 // pred_check
          _
        $region38: #{tpu_custom_call.1} parent=27 // pred_check_branch
          %271 = sbr.rel (%p268) target = $region40
        $region39: #{tpu_custom_call.1} parent=27 // pred_region
          %272 = vst [vmem:[#allocation10] sm:$0xff] 0.0
          %273 = vst [vmem:[#allocation10 + $0x8] sm:$0xff] 0.0
          %274 = vst [vmem:[#allocation3] sm:$0x1] 0.0
          %275 = vst [vmem:[#allocation3 + $0x1] sm:$0x1] 0.0
          %276 = vst [vmem:[#allocation3 + $0x2] sm:$0x1] 0.0
          %277 = vst [vmem:[#allocation3 + $0x3] sm:$0x1] 0.0
          %278 = vst [vmem:[#allocation3 + $0x4] sm:$0x1] 0.0
          %279 = vst [vmem:[#allocation3 + $0x5] sm:$0x1] 0.0
          %280 = vst [vmem:[#allocation3 + $0x6] sm:$0x1] 0.0
          %281 = vst [vmem:[#allocation3 + $0x7] sm:$0x1] 0.0
          %282 = vst [vmem:[#allocation3 + $0x8] sm:$0x1] 0.0
          %283 = vst [vmem:[#allocation3 + $0x9] sm:$0x1] 0.0
          %284 = vst [vmem:[#allocation3 + $0xa] sm:$0x1] 0.0
          %285 = vst [vmem:[#allocation3 + $0xb] sm:$0x1] 0.0
          %286 = vst [vmem:[#allocation3 + $0xc] sm:$0x1] 0.0
          %287 = vst [vmem:[#allocation3 + $0xd] sm:$0x1] 0.0
          %288 = vst [vmem:[#allocation3 + $0xe] sm:$0x1] 0.0
          %289 = vst [vmem:[#allocation3 + $0xf] sm:$0x1] 0.0
          %290 = vst [vmem:[#allocation3 + $0x10] sm:$0x1] 0.0
          %291 = vst [vmem:[#allocation3 + $0x11] sm:$0x1] 0.0
          %292 = vst [vmem:[#allocation3 + $0x12] sm:$0x1] 0.0
          %293 = vst [vmem:[#allocation3 + $0x13] sm:$0x1] 0.0
          %294 = vst [vmem:[#allocation3 + $0x14] sm:$0x1] 0.0
          %295 = vst [vmem:[#allocation3 + $0x15] sm:$0x1] 0.0
          %296 = vst [vmem:[#allocation3 + $0x16] sm:$0x1] 0.0
          %297 = vst [vmem:[#allocation3 + $0x17] sm:$0x1] 0.0
          %298 = vst [vmem:[#allocation4] sm:$0x1] 0.0
          %299 = vst [vmem:[#allocation4 + $0x1] sm:$0x1] 0.0
          %300 = vst [vmem:[#allocation4 + $0x2] sm:$0x1] 0.0
          %301 = vst [vmem:[#allocation4 + $0x3] sm:$0x1] 0.0
          %302 = vst [vmem:[#allocation4 + $0x4] sm:$0x1] 0.0
          %303 = vst [vmem:[#allocation4 + $0x5] sm:$0x1] 0.0
        $region40: #{tpu_custom_call.1} parent=27 // pred_fallthru
          _
        %v304 = vld [vmem:[%s243] sm:$0xff]
        %v305 = vld [vmem:[%s243 + $0x8] sm:$0xff]
        %v306 = vld [vmem:[%s243 + $0x10] sm:$0xff]
        %v307 = vld [vmem:[%s243 + $0x18] sm:$0xff]
        %v308 = vld [vmem:[%s243 + $0x20] sm:$0xff]
        %v309 = vld [vmem:[%s243 + $0x28] sm:$0xff]
        %v310 = vld [vmem:[%s243 + $0x30] sm:$0xff]
        %v311 = vld [vmem:[%s243 + $0x38] sm:$0xff]
        %v312 = vld [vmem:[%s243 + $0x40] sm:$0xff]
        %v313 = vld [vmem:[%s243 + $0x48] sm:$0xff]
        %v314 = vld [vmem:[%s243 + $0x50] sm:$0xff]
        %v315 = vld [vmem:[%s243 + $0x58] sm:$0xff]
        // Predicated region
        $region41: #{tpu_custom_call.1} parent=27 // pred_check
          %p316 = pneg %p267
        $region42: #{tpu_custom_call.1} parent=27 // pred_check_branch
          %318 = sbr.rel (%p316) target = $region44
        $region43: #{tpu_custom_call.1} parent=27 // pred_region
          %v319 = vld [vmem:[#allocation4] sm:$0x1]
          %v320 = vld [vmem:[#allocation4 + $0x1] sm:$0x1]
          %v321 = vld [vmem:[#allocation4 + $0x2] sm:$0x1]
          %v322 = vld [vmem:[#allocation4 + $0x3] sm:$0x1]
          %v323 = vld [vmem:[#allocation4 + $0x4] sm:$0x1]
          %v324 = vld [vmem:[#allocation4 + $0x5] sm:$0x1]
          %v325 = vlaneseq
          %v326 = vand.u32 %v325, 127
          %vm327 = vcmp.eq.s32.totalorder %v326, 0
          %328 = vrot.lane.b32.xlu0 %v304, 1
          %v329 = vpop.permute.xlu0 %328
          %330 = vrot.lane.b32.xlu0 %v305, 1
          %v331 = vpop.permute.xlu0 %330
          %332 = vrot.lane.b32.xlu0 %v306, 1
          %v333 = vpop.permute.xlu0 %332
          %334 = vrot.lane.b32.xlu0 %v307, 1
          %v335 = vpop.permute.xlu0 %334
          %336 = vrot.lane.b32.xlu0 %v308, 1
          %v337 = vpop.permute.xlu0 %336
          %338 = vrot.lane.b32.xlu0 %v309, 1
          %v339 = vpop.permute.xlu0 %338
          %340 = vrot.lane.b32.xlu0 %v310, 1
          %v341 = vpop.permute.xlu0 %340
          %342 = vrot.lane.b32.xlu0 %v311, 1
          %v343 = vpop.permute.xlu0 %342
          %344 = vrot.lane.b32.xlu0 %v312, 1
          %v345 = vpop.permute.xlu0 %344
          %346 = vrot.lane.b32.xlu0 %v313, 1
          %v347 = vpop.permute.xlu0 %346
          %348 = vrot.lane.b32.xlu0 %v314, 1
          %v349 = vpop.permute.xlu0 %348
          %350 = vrot.lane.b32.xlu0 %v315, 1
          %v351 = vpop.permute.xlu0 %350
          %v352 = vsel %vm327, 0.0, %v329
          %v353 = vsel %vm327, 0.0, %v331
          %v354 = vsel %vm327, 0.0, %v333
          %v355 = vsel %vm327, 0.0, %v335
          %v356 = vsel %vm327, 0.0, %v337
          %v357 = vsel %vm327, 0.0, %v339
          %v358 = vsel %vm327, 0.0, %v341
          %v359 = vsel %vm327, 0.0, %v343
          %v360 = vsel %vm327, 0.0, %v345
          %v361 = vsel %vm327, 0.0, %v347
          %v362 = vsel %vm327, 0.0, %v349
          %v363 = vsel %vm327, 0.0, %v351
          %v364 = vlaneseq
          %v365 = vshrl.u32 %v364, 7
          %v366 = vadd.s32 %v365, 8
          %vm367 = vcmp.eq.s32.totalorder %v365, 0
          %vm368 = vcmp.eq.s32.totalorder %v366, 0
          %v375 = vlaneseq
          %v376 = vshrl.u32 %v375, 7
          %v377 = vsub.s32 0, %v376
          %v378 = vrot.slane %v319, %v377
          %v379 = vlaneseq
          %v380 = vshrl.u32 %v379, 7
          %v381 = vsub.s32 0, %v380
          %v382 = vrot.slane %v320, %v381
          %v383 = vlaneseq
          %v384 = vshrl.u32 %v383, 7
          %v385 = vsub.s32 0, %v384
          %v386 = vrot.slane %v321, %v385
          %v387 = vlaneseq
          %v388 = vshrl.u32 %v387, 7
          %v389 = vsub.s32 0, %v388
          %v390 = vrot.slane %v322, %v389
          %v391 = vlaneseq
          %v392 = vshrl.u32 %v391, 7
          %v393 = vsub.s32 0, %v392
          %v394 = vrot.slane %v323, %v393
          %v395 = vlaneseq
          %v396 = vshrl.u32 %v395, 7
          %v397 = vsub.s32 0, %v396
          %v398 = vrot.slane %v324, %v397
          %v405 = vrot.slane %v304, 7
          %v406 = vrot.slane %v306, 7
          %v407 = vrot.slane %v308, 7
          %v408 = vrot.slane %v310, 7
          %v409 = vrot.slane %v312, 7
          %v410 = vrot.slane %v314, 7
          %v411 = vrot.slane %v305, 7
          %v412 = vrot.slane %v307, 7
          %v413 = vrot.slane %v309, 7
          %v414 = vrot.slane %v311, 7
          %v415 = vrot.slane %v313, 7
          %v416 = vrot.slane %v315, 7
          %vm417 = vcmp.lt.s32.totalorder %v365, 1
          %v418 = vsel %vm417, %v405, %v411
          %v419 = vsel %vm417, %v406, %v412
          %v420 = vsel %vm417, %v407, %v413
          %v421 = vsel %vm417, %v408, %v414
          %v422 = vsel %vm417, %v409, %v415
          %v423 = vsel %vm417, %v410, %v416
          %v424 = vsel %vm417, %v411, %v405
          %v425 = vsel %vm417, %v412, %v406
          %v426 = vsel %vm417, %v413, %v407
          %v427 = vsel %vm417, %v414, %v408
          %v428 = vsel %vm417, %v415, %v409
          %v429 = vsel %vm417, %v416, %v410
          %v430 = vsel %vm367, %v378, %v424
          %v431 = vsel %vm368, %v378, %v418
          %v432 = vsel %vm367, %v382, %v425
          %v433 = vsel %vm368, %v382, %v419
          %v434 = vsel %vm367, %v386, %v426
          %v435 = vsel %vm368, %v386, %v420
          %v436 = vsel %vm367, %v390, %v427
          %v437 = vsel %vm368, %v390, %v421
          %v438 = vsel %vm367, %v394, %v428
          %v439 = vsel %vm368, %v394, %v422
          %v440 = vsel %vm367, %v398, %v429
          %v441 = vsel %vm368, %v398, %v423
          %v442 = vsub.f32 %v352, %v304
          %v443 = vsub.f32 %v353, %v305
          %v444 = vsub.f32 %v354, %v306
          %v445 = vsub.f32 %v355, %v307
          %v446 = vsub.f32 %v356, %v308
          %v447 = vsub.f32 %v357, %v309
          %v448 = vsub.f32 %v358, %v310
          %v449 = vsub.f32 %v359, %v311
          %v450 = vsub.f32 %v360, %v312
          %v451 = vsub.f32 %v361, %v313
          %v452 = vsub.f32 %v362, %v314
          %v453 = vsub.f32 %v363, %v315
          %v454 = vand.u32 2147483647, %v442
          %v455 = vand.u32 2147483647, %v443
          %v456 = vand.u32 2147483647, %v444
          %v457 = vand.u32 2147483647, %v445
          %v458 = vand.u32 2147483647, %v446
          %v459 = vand.u32 2147483647, %v447
          %v460 = vand.u32 2147483647, %v448
          %v461 = vand.u32 2147483647, %v449
          %v462 = vand.u32 2147483647, %v450
          %v463 = vand.u32 2147483647, %v451
          %v464 = vand.u32 2147483647, %v452
          %v465 = vand.u32 2147483647, %v453
          %v466 = vsub.f32 %v430, %v304
          %v467 = vsub.f32 %v431, %v305
          %v468 = vsub.f32 %v432, %v306
          %v469 = vsub.f32 %v433, %v307
          %v470 = vsub.f32 %v434, %v308
          %v471 = vsub.f32 %v435, %v309
          %v472 = vsub.f32 %v436, %v310
          %v473 = vsub.f32 %v437, %v311
          %v474 = vsub.f32 %v438, %v312
          %v475 = vsub.f32 %v439, %v313
          %v476 = vsub.f32 %v440, %v314
          %v477 = vsub.f32 %v441, %v315
          %v478 = vand.u32 2147483647, %v466
          %v479 = vand.u32 2147483647, %v467
          %v480 = vand.u32 2147483647, %v468
          %v481 = vand.u32 2147483647, %v469
          %v482 = vand.u32 2147483647, %v470
          %v483 = vand.u32 2147483647, %v471
          %v484 = vand.u32 2147483647, %v472
          %v485 = vand.u32 2147483647, %v473
          %v486 = vand.u32 2147483647, %v474
          %v487 = vand.u32 2147483647, %v475
          %v488 = vand.u32 2147483647, %v476
          %v489 = vand.u32 2147483647, %v477
          %v490 = vadd.f32 %v454, %v478
          %v491 = vadd.f32 %v455, %v479
          %v492 = vadd.f32 %v456, %v480
          %v493 = vadd.f32 %v457, %v481
          %v494 = vadd.f32 %v458, %v482
          %v495 = vadd.f32 %v459, %v483
          %v496 = vadd.f32 %v460, %v484
          %v497 = vadd.f32 %v461, %v485
          %v498 = vadd.f32 %v462, %v486
          %v499 = vadd.f32 %v463, %v487
          %v500 = vadd.f32 %v464, %v488
          %v501 = vadd.f32 %v465, %v489
          %502 = vst [vmem:[#allocation2] sm:$0xff] %v490
          %503 = vst [vmem:[#allocation2 + $0x8] sm:$0xff] %v491
          %504 = vst [vmem:[#allocation2 + $0x10] sm:$0xff] %v492
          %505 = vst [vmem:[#allocation2 + $0x18] sm:$0xff] %v493
          %506 = vst [vmem:[#allocation2 + $0x20] sm:$0xff] %v494
          %507 = vst [vmem:[#allocation2 + $0x28] sm:$0xff] %v495
          %508 = vst [vmem:[#allocation2 + $0x30] sm:$0xff] %v496
          %509 = vst [vmem:[#allocation2 + $0x38] sm:$0xff] %v497
          %510 = vst [vmem:[#allocation2 + $0x40] sm:$0xff] %v498
          %511 = vst [vmem:[#allocation2 + $0x48] sm:$0xff] %v499
          %512 = vst [vmem:[#allocation2 + $0x50] sm:$0xff] %v500
          %513 = vst [vmem:[#allocation2 + $0x58] sm:$0xff] %v501
          %514 = vst [vmem:[#allocation4 - $0x7] sm:$0x80] %v305
          %515 = vst [vmem:[#allocation4 - $0x6] sm:$0x80] %v307
          %516 = vst [vmem:[#allocation4 - $0x5] sm:$0x80] %v309
          %517 = vst [vmem:[#allocation4 - $0x4] sm:$0x80] %v311
          %518 = vst [vmem:[#allocation4 - $0x3] sm:$0x80] %v313
          %519 = vst [vmem:[#allocation4 - $0x2] sm:$0x80] %v315
        $region44: #{tpu_custom_call.1} parent=27 // pred_fallthru
          _
        %v520 = vld [vmem:[%s234] sm:$0xff]
        %v521 = vld [vmem:[%s234 + $0x8] sm:$0xff]
        %v522 = vld [vmem:[%s234 + $0x10] sm:$0xff]
        %v523 = vld [vmem:[%s234 + $0x18] sm:$0xff]
        %v524 = vld [vmem:[%s234 + $0x20] sm:$0xff]
        %v525 = vld [vmem:[%s234 + $0x28] sm:$0xff]
        %v526 = vld [vmem:[%s234 + $0x30] sm:$0xff]
        %v527 = vld [vmem:[%s234 + $0x38] sm:$0xff]
        %v528 = vld [vmem:[%s234 + $0x40] sm:$0xff]
        %v529 = vld [vmem:[%s234 + $0x48] sm:$0xff]
        %v530 = vld [vmem:[%s234 + $0x50] sm:$0xff]
        %v531 = vld [vmem:[%s234 + $0x58] sm:$0xff]
        %s532 = smul.u32 %s25, 6
        %s533 = scalar_lea.vmem [#allocation3], %s532
        %v534 = vld [vmem:[%s533] sm:$0x1]
        %v535 = vld [vmem:[%s533 + $0x1] sm:$0x1]
        %v536 = vld [vmem:[%s533 + $0x2] sm:$0x1]
        %v537 = vld [vmem:[%s533 + $0x3] sm:$0x1]
        %v538 = vld [vmem:[%s533 + $0x4] sm:$0x1]
        %v539 = vld [vmem:[%s533 + $0x5] sm:$0x1]
        %v540 = vlaneseq
        %v541 = vand.u32 %v540, 127
        %vm542 = vcmp.eq.s32.totalorder %v541, 0
        %543 = vrot.lane.b32.xlu0 %v520, 1
        %v544 = vpop.permute.xlu0 %543
        %545 = vrot.lane.b32.xlu0 %v521, 1
        %v546 = vpop.permute.xlu0 %545
        %547 = vrot.lane.b32.xlu0 %v522, 1
        %v548 = vpop.permute.xlu0 %547
        %549 = vrot.lane.b32.xlu0 %v523, 1
        %v550 = vpop.permute.xlu0 %549
        %551 = vrot.lane.b32.xlu0 %v524, 1
        %v552 = vpop.permute.xlu0 %551
        %553 = vrot.lane.b32.xlu0 %v525, 1
        %v554 = vpop.permute.xlu0 %553
        %555 = vrot.lane.b32.xlu0 %v526, 1
        %v556 = vpop.permute.xlu0 %555
        %557 = vrot.lane.b32.xlu0 %v527, 1
        %v558 = vpop.permute.xlu0 %557
        %559 = vrot.lane.b32.xlu0 %v528, 1
        %v560 = vpop.permute.xlu0 %559
        %561 = vrot.lane.b32.xlu0 %v529, 1
        %v562 = vpop.permute.xlu0 %561
        %563 = vrot.lane.b32.xlu0 %v530, 1
        %v564 = vpop.permute.xlu0 %563
        %565 = vrot.lane.b32.xlu0 %v531, 1
        %v566 = vpop.permute.xlu0 %565
        %v567 = vsel %vm542, 0.0, %v544
        %v568 = vsel %vm542, 0.0, %v546
        %v569 = vsel %vm542, 0.0, %v548
        %v570 = vsel %vm542, 0.0, %v550
        %v571 = vsel %vm542, 0.0, %v552
        %v572 = vsel %vm542, 0.0, %v554
        %v573 = vsel %vm542, 0.0, %v556
        %v574 = vsel %vm542, 0.0, %v558
        %v575 = vsel %vm542, 0.0, %v560
        %v576 = vsel %vm542, 0.0, %v562
        %v577 = vsel %vm542, 0.0, %v564
        %v578 = vsel %vm542, 0.0, %v566
        %v579 = vlaneseq
        %v580 = vshrl.u32 %v579, 7
        %v581 = vadd.s32 %v580, 8
        %vm582 = vcmp.eq.s32.totalorder %v580, 0
        %vm583 = vcmp.eq.s32.totalorder %v581, 0
        %v590 = vlaneseq
        %v591 = vshrl.u32 %v590, 7
        %v592 = vsub.s32 0, %v591
        %v593 = vrot.slane %v534, %v592
        %v594 = vlaneseq
        %v595 = vshrl.u32 %v594, 7
        %v596 = vsub.s32 0, %v595
        %v597 = vrot.slane %v535, %v596
        %v598 = vlaneseq
        %v599 = vshrl.u32 %v598, 7
        %v600 = vsub.s32 0, %v599
        %v601 = vrot.slane %v536, %v600
        %v602 = vlaneseq
        %v603 = vshrl.u32 %v602, 7
        %v604 = vsub.s32 0, %v603
        %v605 = vrot.slane %v537, %v604
        %v606 = vlaneseq
        %v607 = vshrl.u32 %v606, 7
        %v608 = vsub.s32 0, %v607
        %v609 = vrot.slane %v538, %v608
        %v610 = vlaneseq
        %v611 = vshrl.u32 %v610, 7
        %v612 = vsub.s32 0, %v611
        %v613 = vrot.slane %v539, %v612
        %v620 = vrot.slane %v520, 7
        %v621 = vrot.slane %v522, 7
        %v622 = vrot.slane %v524, 7
        %v623 = vrot.slane %v526, 7
        %v624 = vrot.slane %v528, 7
        %v625 = vrot.slane %v530, 7
        %v626 = vrot.slane %v521, 7
        %v627 = vrot.slane %v523, 7
        %v628 = vrot.slane %v525, 7
        %v629 = vrot.slane %v527, 7
        %v630 = vrot.slane %v529, 7
        %v631 = vrot.slane %v531, 7
        %vm632 = vcmp.lt.s32.totalorder %v580, 1
        %v633 = vsel %vm632, %v620, %v626
        %v634 = vsel %vm632, %v621, %v627
        %v635 = vsel %vm632, %v622, %v628
        %v636 = vsel %vm632, %v623, %v629
        %v637 = vsel %vm632, %v624, %v630
        %v638 = vsel %vm632, %v625, %v631
        %v639 = vsel %vm632, %v626, %v620
        %v640 = vsel %vm632, %v627, %v621
        %v641 = vsel %vm632, %v628, %v622
        %v642 = vsel %vm632, %v629, %v623
        %v643 = vsel %vm632, %v630, %v624
        %v644 = vsel %vm632, %v631, %v625
        %v645 = vsel %vm582, %v593, %v639
        %v646 = vsel %vm583, %v593, %v633
        %v647 = vsel %vm582, %v597, %v640
        %v648 = vsel %vm583, %v597, %v634
        %v649 = vsel %vm582, %v601, %v641
        %v650 = vsel %vm583, %v601, %v635
        %v651 = vsel %vm582, %v605, %v642
        %v652 = vsel %vm583, %v605, %v636
        %v653 = vsel %vm582, %v609, %v643
        %v654 = vsel %vm583, %v609, %v637
        %v655 = vsel %vm582, %v613, %v644
        %v656 = vsel %vm583, %v613, %v638
        %v657 = vsub.f32 %v567, %v520
        %v658 = vsub.f32 %v568, %v521
        %v659 = vsub.f32 %v569, %v522
        %v660 = vsub.f32 %v570, %v523
        %v661 = vsub.f32 %v571, %v524
        %v662 = vsub.f32 %v572, %v525
        %v663 = vsub.f32 %v573, %v526
        %v664 = vsub.f32 %v574, %v527
        %v665 = vsub.f32 %v575, %v528
        %v666 = vsub.f32 %v576, %v529
        %v667 = vsub.f32 %v577, %v530
        %v668 = vsub.f32 %v578, %v531
        %v669 = vand.u32 2147483647, %v657
        %v670 = vand.u32 2147483647, %v658
        %v671 = vand.u32 2147483647, %v659
        %v672 = vand.u32 2147483647, %v660
        %v673 = vand.u32 2147483647, %v661
        %v674 = vand.u32 2147483647, %v662
        %v675 = vand.u32 2147483647, %v663
        %v676 = vand.u32 2147483647, %v664
        %v677 = vand.u32 2147483647, %v665
        %v678 = vand.u32 2147483647, %v666
        %v679 = vand.u32 2147483647, %v667
        %v680 = vand.u32 2147483647, %v668
        %v681 = vsub.f32 %v645, %v520
        %v682 = vsub.f32 %v646, %v521
        %v683 = vsub.f32 %v647, %v522
        %v684 = vsub.f32 %v648, %v523
        %v685 = vsub.f32 %v649, %v524
        %v686 = vsub.f32 %v650, %v525
        %v687 = vsub.f32 %v651, %v526
        %v688 = vsub.f32 %v652, %v527
        %v689 = vsub.f32 %v653, %v528
        %v690 = vsub.f32 %v654, %v529
        %v691 = vsub.f32 %v655, %v530
        %v692 = vsub.f32 %v656, %v531
        %v693 = vand.u32 2147483647, %v681
        %v694 = vand.u32 2147483647, %v682
        %v695 = vand.u32 2147483647, %v683
        %v696 = vand.u32 2147483647, %v684
        %v697 = vand.u32 2147483647, %v685
        %v698 = vand.u32 2147483647, %v686
        %v699 = vand.u32 2147483647, %v687
        %v700 = vand.u32 2147483647, %v688
        %v701 = vand.u32 2147483647, %v689
        %v702 = vand.u32 2147483647, %v690
        %v703 = vand.u32 2147483647, %v691
        %v704 = vand.u32 2147483647, %v692
        %v705 = vadd.f32 %v669, %v693
        %v706 = vadd.f32 %v670, %v694
        %v707 = vadd.f32 %v671, %v695
        %v708 = vadd.f32 %v672, %v696
        %v709 = vadd.f32 %v673, %v697
        %v710 = vadd.f32 %v674, %v698
        %v711 = vadd.f32 %v675, %v699
        %v712 = vadd.f32 %v676, %v700
        %v713 = vadd.f32 %v677, %v701
        %v714 = vadd.f32 %v678, %v702
        %v715 = vadd.f32 %v679, %v703
        %v716 = vadd.f32 %v680, %v704
        %717 = vst [vmem:[%s533 - $0x7] sm:$0x80] %v521
        %718 = vst [vmem:[%s533 - $0x6] sm:$0x80] %v523
        %719 = vst [vmem:[%s533 - $0x5] sm:$0x80] %v525
        %720 = vst [vmem:[%s533 - $0x4] sm:$0x80] %v527
        %721 = vst [vmem:[%s533 - $0x3] sm:$0x80] %v529
        %722 = vst [vmem:[%s533 - $0x2] sm:$0x80] %v531
        %v723 = vsub.f32 %v520, %v304
        %v724 = vsub.f32 %v521, %v305
        %v725 = vsub.f32 %v522, %v306
        %v726 = vsub.f32 %v523, %v307
        %v727 = vsub.f32 %v524, %v308
        %v728 = vsub.f32 %v525, %v309
        %v729 = vsub.f32 %v526, %v310
        %v730 = vsub.f32 %v527, %v311
        %v731 = vsub.f32 %v528, %v312
        %v732 = vsub.f32 %v529, %v313
        %v733 = vsub.f32 %v530, %v314
        %v734 = vsub.f32 %v531, %v315
        %v735 = vmul.f32 %v723, %v723
        %v736 = vmul.f32 %v724, %v724
        %v737 = vmul.f32 %v725, %v725
        %v738 = vmul.f32 %v726, %v726
        %v739 = vmul.f32 %v727, %v727
        %v740 = vmul.f32 %v728, %v728
        %v741 = vmul.f32 %v729, %v729
        %v742 = vmul.f32 %v730, %v730
        %v743 = vmul.f32 %v731, %v731
        %v744 = vmul.f32 %v732, %v732
        %v745 = vmul.f32 %v733, %v733
        %v746 = vmul.f32 %v734, %v734
        %v747 = vld [vmem:[#allocation2] sm:$0xff]
        %v748 = vld [vmem:[#allocation2 + $0x8] sm:$0xff]
        %v749 = vld [vmem:[#allocation2 + $0x10] sm:$0xff]
        %v750 = vld [vmem:[#allocation2 + $0x18] sm:$0xff]
        %v751 = vld [vmem:[#allocation2 + $0x20] sm:$0xff]
        %v752 = vld [vmem:[#allocation2 + $0x28] sm:$0xff]
        %v753 = vld [vmem:[#allocation2 + $0x30] sm:$0xff]
        %v754 = vld [vmem:[#allocation2 + $0x38] sm:$0xff]
        %v755 = vld [vmem:[#allocation2 + $0x40] sm:$0xff]
        %v756 = vld [vmem:[#allocation2 + $0x48] sm:$0xff]
        %v757 = vld [vmem:[#allocation2 + $0x50] sm:$0xff]
        %v758 = vld [vmem:[#allocation2 + $0x58] sm:$0xff]
        %v759 = vsub.f32 %v705, %v747
        %v760 = vsub.f32 %v706, %v748
        %v761 = vsub.f32 %v707, %v749
        %v762 = vsub.f32 %v708, %v750
        %v763 = vsub.f32 %v709, %v751
        %v764 = vsub.f32 %v710, %v752
        %v765 = vsub.f32 %v711, %v753
        %v766 = vsub.f32 %v712, %v754
        %v767 = vsub.f32 %v713, %v755
        %v768 = vsub.f32 %v714, %v756
        %v769 = vsub.f32 %v715, %v757
        %v770 = vsub.f32 %v716, %v758
        %v771 = vand.u32 2147483647, %v759
        %v772 = vand.u32 2147483647, %v760
        %v773 = vand.u32 2147483647, %v761
        %v774 = vand.u32 2147483647, %v762
        %v775 = vand.u32 2147483647, %v763
        %v776 = vand.u32 2147483647, %v764
        %v777 = vand.u32 2147483647, %v765
        %v778 = vand.u32 2147483647, %v766
        %v779 = vand.u32 2147483647, %v767
        %v780 = vand.u32 2147483647, %v768
        %v781 = vand.u32 2147483647, %v769
        %v782 = vand.u32 2147483647, %v770
        %v783 = vadd.f32 %v735, %v771
        %v784 = vadd.f32 %v736, %v772
        %v785 = vadd.f32 %v737, %v773
        %v786 = vadd.f32 %v738, %v774
        %v787 = vadd.f32 %v739, %v775
        %v788 = vadd.f32 %v740, %v776
        %v789 = vadd.f32 %v741, %v777
        %v790 = vadd.f32 %v742, %v778
        %v791 = vadd.f32 %v743, %v779
        %v792 = vadd.f32 %v744, %v780
        %v793 = vadd.f32 %v745, %v781
        %v794 = vadd.f32 %v746, %v782
        %v795 = vld [vmem:[#allocation10] sm:$0xff]
        %v796 = vld [vmem:[#allocation10 + $0x8] sm:$0xff]
        %v797 = vadd.f32 %v783, %v785
        %v798 = vadd.f32 %v797, %v787
        %v799 = vadd.f32 %v798, %v789
        %v800 = vadd.f32 %v799, %v791
        %v801 = vadd.f32 %v800, %v793
        %v802 = vadd.f32 %v784, %v786
        %v803 = vadd.f32 %v802, %v788
        %v804 = vadd.f32 %v803, %v790
        %v805 = vadd.f32 %v804, %v792
        %v806 = vadd.f32 %v805, %v794
        %v807 = vadd.f32 %v795, %v801
        %v808 = vadd.f32 %v796, %v806
        %809 = vst [vmem:[#allocation10] sm:$0xff] %v807
        %810 = vst [vmem:[#allocation10 + $0x8] sm:$0xff] %v808
        // Predicated region
        $region45: #{tpu_custom_call.1} parent=27 // pred_check
          %p811 = pneg %p99
        $region46: #{tpu_custom_call.1} parent=27 // pred_check_branch
          %813 = sbr.rel (%p811) target = $region48
        $region47: #{tpu_custom_call.1} parent=27 // pred_region
          %s815 = ssub.s32 256, 256
          %816 = vsyncadd [#allocation7], %s815
          %s817 = sshll.u32 [#allocation10], 4
          %s818 = int_to_ptr.vmem [resolvable:$true] %s817
          %823 = dma.vmem_to_hbm [thread:$0]  %s818, 256, %s2, [#allocation7], 128, 128, 8
        $region48: #{tpu_custom_call.1} parent=27 // pred_fallthru
          _
        // Predicated region
        $region49: #{tpu_custom_call.1} parent=27 // pred_check
          %p824 = pneg %p99
        $region50: #{tpu_custom_call.1} parent=27 // pred_check_branch
          %826 = sbr.rel (%p824) target = $region52
        $region51: #{tpu_custom_call.1} parent=27 // pred_region
          %827 = dma.done [#allocation7], 256
        $region52: #{tpu_custom_call.1} parent=27 // pred_fallthru
          _
      $region28: #{tpu_custom_call.1} parent=5 // pred_fallthru
        _
      %p828 = scmp.le.s32.totalorder 2, %s15
      // Predicated region
      $region53: #{tpu_custom_call.1} parent=5 // pred_check
        %p829 = pneg %p828
      $region54: #{tpu_custom_call.1} parent=5 // pred_check_branch
        %831 = sbr.rel (%p829) target = $region56
      $region55: #{tpu_custom_call.1} parent=5 // pred_region
        %s832 = ssub.s32 %s15, 2
      $region56: #{tpu_custom_call.1} parent=5 // pred_fallthru
        _
    $region6: #{tpu_custom_call.1} parent=1 // loop_footer
      %s19 = sadd.s32 1, %s15
    $region7: #{tpu_custom_call.1} parent=1 // loop_footer_branch
      %14 = sbr.rel target = $region3
    $region8: #{tpu_custom_call.1} parent=1 // loop_exit
      _
    %833 = vsyncpa [#allocation6], 1
    %s834 = scalar_lea.sflag [#allocation6], 1
    %835 = vsyncpa %s834, 1
    %836 = vsyncpa [#allocation9], 1
    %s837 = scalar_lea.sflag [#allocation9], 1
    %838 = vsyncpa %s837, 1
    %839 = vsyncpa [#allocation7], 1
    %s840 = scalar_lea.sflag [#allocation7], 1
    %841 = vsyncpa %s840, 1

</llo_original>
